<compile_context>
chip_gen: v7x
topology: tpu7x:2x2x1
jax: 0.10.0
libtpu: 0.0.40
codegen_flags: <defaults>
</compile_context>

<pallas_src>
import numpy as np
import jax
import jax.numpy as jnp
from jax.experimental import pallas as pl
from jax.experimental.pallas import tpu as pltpu


# ---------------------------------------------------------------------------
# Host-side parameter construction (deterministic, no file/network I/O)
# ---------------------------------------------------------------------------
def gaussian_kernel1d(kernel_size: int, sigma: float) -> np.ndarray:
    """torchvision _get_gaussian_kernel1d: normalized 1D gaussian."""
    half = (kernel_size - 1) * 0.5
    x = np.linspace(-half, half, kernel_size)
    pdf = np.exp(-0.5 * (x / sigma) ** 2)
    return (pdf / pdf.sum()).astype(np.float32)


def _reflect_index(idx: int, n: int) -> int:
    """PyTorch / jnp 'reflect' padding index (no edge repeat)."""
    if idx < 0:
        return -idx
    if idx >= n:
        return 2 * n - 2 - idx
    return idx


def blur_matrix(n: int, k1: np.ndarray) -> np.ndarray:
    """Banded (n, n) matrix G so that G @ x == 1D reflect-padded gaussian conv of x."""
    K = len(k1)
    p = K // 2
    G = np.zeros((n, n), np.float32)
    for r in range(n):
        for i in range(K):
            G[r, _reflect_index(r - p + i, n)] += k1[i]
    return G


def blockdiag_ght(n_blocks: int, w: int, k1: np.ndarray) -> np.ndarray:
    """(n_blocks*w, n_blocks*w) block-diagonal right-multiply horizontal blur."""
    ght = blur_matrix(w, k1).T
    return np.kron(np.eye(n_blocks, dtype=np.float32), ght)


def get_scheduler(dist_loss_weight, step=None) -> float:
    if step is not None:
        return float(dist_loss_weight * np.exp(-(1.0 / 5) * ((step - 300) / 20) ** 2))
    return float(dist_loss_weight)


# ---------------------------------------------------------------------------
# Wrapper-side relayout to a lane-dense slab (pure JAX, outside the kernel)
# ---------------------------------------------------------------------------
def pack_nchw(x):
    """(B, C, H, W) -> (H, B*C*W); column index = (b*C + c)*W + w."""
    B, C, H, W = x.shape
    return jnp.transpose(x, (2, 0, 1, 3)).reshape(H, B * C * W)


def unpack_nchw(xp, B, C, H, W):
    """(H, B*C*W) -> (B, C, H, W).  Inverse of pack_nchw."""
    return jnp.transpose(xp.reshape(H, B, C, W), (1, 2, 0, 3))


# ---------------------------------------------------------------------------
# Pallas kernels (single grid step, everything VMEM-resident)
# ---------------------------------------------------------------------------
def _blur_packed_kernel(gv_ref, ghd_ref, x_ref, out_ref):
    # gv: (H, H) bf16, ghd: (N, N) bf16 block-diag, x: (H, N) bf16 packed.
    # out: (H, N) f32 = Gv @ X @ blockdiag(Gh^T), f32 accumulation on the MXU.
    tmp = jnp.dot(gv_ref[...], x_ref[...], preferred_element_type=jnp.float32)
    out_ref[...] = jnp.dot(tmp.astype(jnp.bfloat16), ghd_ref[...],
                           preferred_element_type=jnp.float32)


def _tone_loss_kernel(scale_ref, gv_ref, ghd_ref, cur_ref, init_ref, out_ref):
    # scale: (1,) SMEM = scheduler(step) / (B*C*H*W)
    # cur: (H, B*C*W) bf16 packed raster; init: (H, B*C*W) f32 packed blurred init.
    tmp = jnp.dot(gv_ref[...], cur_ref[...], preferred_element_type=jnp.float32)
    blurred = jnp.dot(tmp.astype(jnp.bfloat16), ghd_ref[...],
                      preferred_element_type=jnp.float32)
    diff = blurred - init_ref[...]                       # f32, lane-dense slab
    out_ref[0, 0] = jnp.sum(diff * diff) * scale_ref[0]  # scalar exits via SMEM


# ---------------------------------------------------------------------------
# Wrappers
# ---------------------------------------------------------------------------
_VMEM = pl.BlockSpec(memory_space=pltpu.MemorySpace.VMEM)
_SMEM = pl.BlockSpec(memory_space=pltpu.MemorySpace.SMEM)


def gaussian_blur_packed(x_packed, gv_bf16, ghd_bf16):
    """Reflect-padded gaussian blur of a packed (H, N) slab; returns f32 (H, N)."""
    H, N = x_packed.shape
    return pl.pallas_call(
        _blur_packed_kernel,
        out_shape=jax.ShapeDtypeStruct((H, N), jnp.float32),
        in_specs=[_VMEM, _VMEM, _VMEM],
        out_specs=_VMEM,
    )(gv_bf16, ghd_bf16, x_packed.astype(jnp.bfloat16))


def set_image_init(im_init_hwc, gv_bf16, ghd_c_bf16):
    """HWC image -> packed blurred init (H, C*W); mirrors torch set_image_init."""
    im_nchw = jnp.transpose(im_init_hwc, (2, 0, 1))[None]        # (1, C, H, W)
    return gaussian_blur_packed(pack_nchw(im_nchw), gv_bf16, ghd_c_bf16)


def tone_loss(cur_raster, init_packed, gv_bf16, ghd_bc_bf16, dist_loss_weight,
              step=None):
    """Fused blur(cur_raster) + MSE(init_blurred, .) * scheduler(step) -> scalar."""
    B, C, H, W = cur_raster.shape
    cur_packed = pack_nchw(cur_raster).astype(jnp.bfloat16)      # (H, B*C*W)
    # init_packed is (H, C*W); tile along lanes to match batch (no-op for B=1).
    # NOTE: for B > 1 this reproduces broadcasting-MSE arithmetic (torch's
    # nn.MSELoss would warn on the size mismatch); mean is over B*C*H*W elems.
    init_bc = jnp.tile(init_packed, (1, B)) if B > 1 else init_packed
    scale = jnp.asarray(
        [get_scheduler(dist_loss_weight, step) / float(B * C * H * W)], jnp.float32)
    out = pl.pallas_call(
        _tone_loss_kernel,
        out_shape=jax.ShapeDtypeStruct((1, 1), jnp.float32),
        in_specs=[_SMEM, _VMEM, _VMEM, _VMEM, _VMEM],
        out_specs=_SMEM,
    )(scale, gv_bf16, ghd_bc_bf16, cur_packed, init_bc)
    return out[0, 0]


# ---------------------------------------------------------------------------
# Pure-JAX reference (independent path: jnp.pad reflect + full K*K 2D conv, f32)
# ---------------------------------------------------------------------------
def _ref_blur(x, kernel2d):
    B, C, H, W = x.shape
    K = kernel2d.shape[0]
    p = K // 2
    xpad = jnp.pad(x, ((0, 0), (0, 0), (p, p), (p, p)), mode="reflect")
    acc = jnp.zeros_like(x)
    for i in range(K):
        for j in range(K):
            acc = acc + kernel2d[i, j] * xpad[:, :, i:i + H, j:j + W]
    return acc


if __name__ == "__main__":
    # Config (synthetic, deterministic): cfg.loss.tone.*
    dist_loss_weight = 100.0
    pixel_dist_kernel_blur = 5
    pixel_dist_sigma = 2.0
    step = 250

    B, C, H, W = 1, 3, 32, 32
    key = jax.random.PRNGKey(0)
    key_a, key_b = jax.random.split(key)
    im_init = jax.random.uniform(key_a, (H, W, C), dtype=jnp.float32)        # HWC
    cur_raster = jax.random.uniform(key_b, (B, C, H, W), dtype=jnp.float32)  # NCHW

    # Host-side gaussian params -> banded blur matrices encoding reflect padding,
    # shipped to the kernel in bf16 (f32 accumulation stays inside the kernel).
    k1d = gaussian_kernel1d(pixel_dist_kernel_blur, pixel_dist_sigma)
    gv_bf16 = jnp.asarray(blur_matrix(H, k1d), dtype=jnp.bfloat16)            # (H, H)
    ghd_c_bf16 = jnp.asarray(blockdiag_ght(C, W, k1d), dtype=jnp.bfloat16)    # (C*W, C*W)
    ghd_bc_bf16 = jnp.asarray(blockdiag_ght(B * C, W, k1d), dtype=jnp.bfloat16)

    # set_image_init: HWC -> packed (H, C*W) blurred init (Pallas, stays packed).
    init_packed = set_image_init(im_init, gv_bf16, ghd_c_bf16)

    # forward: fused blur + MSE + scheduler scaling (single pallas_call).
    loss = tone_loss(cur_raster, init_packed, gv_bf16, ghd_bc_bf16,
                     dist_loss_weight, step=step)
    loss = jax.block_until_ready(loss)

    # Reference check: independent f32 jnp.pad-reflect + K*K conv.  The Pallas
    # path uses bf16 MXU operands (f32 accumulation), hence the relaxed rtol.
    kernel2d = jnp.asarray(np.outer(k1d, k1d).astype(np.float32))
    im_init_nchw = jnp.transpose(im_init, (2, 0, 1))[None]
    ref_init = _ref_blur(im_init_nchw, kernel2d)
    ref_cur = _ref_blur(cur_raster, kernel2d)
    np.testing.assert_allclose(
        np.asarray(unpack_nchw(init_packed, 1, C, H, W)), np.asarray(ref_init),
        rtol=1e-2, atol=1e-3)
    ref = jnp.mean((ref_init - ref_cur) ** 2) * get_scheduler(dist_loss_weight, step)
    np.testing.assert_allclose(np.asarray(loss), np.asarray(ref),
                               rtol=5e-3, atol=1e-6)

    print("KERNEL_OK")
</pallas_src>

<mosaic_0001>
module attributes {stable_mosaic.version = 11 : i64} {
  func.func @_blur_packed_kernel(%arg0: memref<32x32xbf16, #tpu.memory_space<vmem>>, %arg1: memref<96x96xbf16, #tpu.memory_space<vmem>>, %arg2: memref<32x96xbf16, #tpu.memory_space<vmem>>, %arg3: memref<32x96xf32, #tpu.memory_space<vmem>>) attributes {dimension_semantics = [], scalar_prefetch = 0 : i64, scratch_operands = 0 : i64, tpu.core_type = #tpu.core_type<tc>} {
    %c0 = arith.constant 0 : index
    %c0_0 = arith.constant 0 : index
    %0 = vector.load %arg0[%c0, %c0_0] : memref<32x32xbf16, #tpu.memory_space<vmem>>, vector<32x32xbf16>
    %c0_1 = arith.constant 0 : index
    %c0_2 = arith.constant 0 : index
    %1 = vector.load %arg2[%c0_1, %c0_2] : memref<32x96xbf16, #tpu.memory_space<vmem>>, vector<32x96xbf16>
    %cst = arith.constant dense<0.000000e+00> : vector<32x96xf32>
    %2 = tpu.matmul %0, %1, %cst {dimension_numbers = #tpu.dot_dimension_numbers<[1], [0], [0], [1], [0, 0, 1, 1], [], []>} : vector<32x32xbf16>, vector<32x96xbf16>, vector<32x96xf32> -> vector<32x96xf32>
    %3 = arith.truncf %2 : vector<32x96xf32> to vector<32x96xbf16>
    %c0_3 = arith.constant 0 : index
    %c0_4 = arith.constant 0 : index
    %4 = vector.load %arg1[%c0_3, %c0_4] : memref<96x96xbf16, #tpu.memory_space<vmem>>, vector<96x96xbf16>
    %cst_5 = arith.constant dense<0.000000e+00> : vector<32x96xf32>
    %5 = tpu.matmul %3, %4, %cst_5 {dimension_numbers = #tpu.dot_dimension_numbers<[1], [0], [0], [1], [0, 0, 1, 1], [], []>} : vector<32x96xbf16>, vector<96x96xbf16>, vector<32x96xf32> -> vector<32x96xf32>
    %c0_6 = arith.constant 0 : index
    %c0_7 = arith.constant 0 : index
    %6 = vector.load %arg3[%c0_6, %c0_7] : memref<32x96xf32, #tpu.memory_space<vmem>>, vector<32x96xf32>
    tpu.vector_store %arg3[%c0_6, %c0_7], %5 {strides = array<i32>} : memref<32x96xf32, #tpu.memory_space<vmem>>, vector<32x96xf32>,
    return
  }
}

</mosaic_0001>

<llo_original>
// kernel: tpu_custom_call.1
$region0: #{tpu_custom_call.1}
  #allocation0 [shape = 'u32[]', space=smem, size = 0x4, offset = 0x4, fixed_abs, tag = 'smem constant byte address 0x4 - core index']
  #allocation1 [shape = 'u32[144,128]{1,0:T(1,128)}', space=vmem, size = 0x12000, scoped, tag = 'internal scratch']
  %s0 = inlined_call_operand.hbm [shape: bf16[32,32], index: 0, kind: input, shape index: {}]
  %s1 = inlined_call_operand.hbm [shape: bf16[96,96], index: 1, kind: input, shape index: {}]
  %s2 = inlined_call_operand.hbm [shape: bf16[32,96], index: 2, kind: input, shape index: {}]
  %s3 = inlined_call_operand.hbm [shape: f32[32,96], index: 3, kind: output, shape index: {}]
  %s4 = sld [smem:[#allocation0]]
  $region34: #{tpu_custom_call.1} parent=0
    _
  %s6 = ssub.s32 1, %s4
  %s7 = scalar_select 0, %s6, %s4
  $region1: #{tpu_custom_call.1} parent=0
    #allocation2 [shape = 'u8[8192]{0}', space=vmem, size = 0x2000, scoped, tag = 'input window, operand 0, single buffered']
    #allocation3 [shape = 's32[1]{0}', space=sflag, size = 0x4, scoped, tag = 'scoped memory for tpu_custom_call.1']
    #allocation4 [shape = 's32[1]{0}', space=sflag, size = 0x4, scoped, tag = 'scoped memory for tpu_custom_call.1']
    #allocation5 [shape = 'u8[24576]{0}', space=vmem, size = 0x6000, scoped, tag = 'input window, operand 1, single buffered']
    #allocation6 [shape = 's32[1]{0}', space=sflag, size = 0x4, scoped, tag = 'scoped memory for tpu_custom_call.1']
    #allocation7 [shape = 'u8[8192]{0}', space=vmem, size = 0x2000, scoped, tag = 'input window, operand 2, single buffered']
    #allocation8 [shape = 'u8[16384]{0}', space=vmem, size = 0x4000, scoped, tag = 'output window, operand 0, single buffered']
    %8 = vsyncpa [#allocation3], 0
    %9 = vsyncpa [#allocation6], 0
    %10 = vsyncpa [#allocation4], 0
    // Predicated region
    $region2: #{tpu_custom_call.1} parent=1 // pred_check
      _
    $region3: #{tpu_custom_call.1} parent=1 // pred_check_branch
      %12 = sbr.rel (0) target = $region5
    $region4: #{tpu_custom_call.1} parent=1 // pred_region
      %s14 = ssub.s32 256, 256
      %15 = vsyncadd [#allocation3], %s14
      %s16 = sshll.u32 [#allocation2], 4
      %s17 = int_to_ptr.vmem [resolvable:$true] %s16
      %22 = dma.hbm_to_vmem [thread:$0]  %s0, 256, %s17, [#allocation3], 64, 64, 4
    $region5: #{tpu_custom_call.1} parent=1 // pred_fallthru
      _
    // Predicated region
    $region6: #{tpu_custom_call.1} parent=1 // pred_check
      _
    $region7: #{tpu_custom_call.1} parent=1 // pred_check_branch
      %24 = sbr.rel (0) target = $region9
    $region8: #{tpu_custom_call.1} parent=1 // pred_region
      %s26 = ssub.s32 768, 768
      %27 = vsyncadd [#allocation6], %s26
      %s28 = sshll.u32 [#allocation5], 4
      %s29 = int_to_ptr.vmem [resolvable:$true] %s28
      %34 = dma.hbm_to_vmem [thread:$0]  %s1, 768, %s29, [#allocation6], 64, 64, 4
    $region9: #{tpu_custom_call.1} parent=1 // pred_fallthru
      _
    // Predicated region
    $region10: #{tpu_custom_call.1} parent=1 // pred_check
      _
    $region11: #{tpu_custom_call.1} parent=1 // pred_check_branch
      %36 = sbr.rel (0) target = $region13
    $region12: #{tpu_custom_call.1} parent=1 // pred_region
      %s38 = ssub.s32 256, 256
      %39 = vsyncadd [#allocation6], %s38
      %s40 = sshll.u32 [#allocation7], 4
      %s41 = int_to_ptr.vmem [resolvable:$true] %s40
      %46 = dma.hbm_to_vmem [thread:$0]  %s2, 256, %s41, [#allocation6], 64, 64, 4
    $region13: #{tpu_custom_call.1} parent=1 // pred_fallthru
      _
    // Predicated region
    $region14: #{tpu_custom_call.1} parent=1 // pred_check
      _
    $region15: #{tpu_custom_call.1} parent=1 // pred_check_branch
      %48 = sbr.rel (0) target = $region17
    $region16: #{tpu_custom_call.1} parent=1 // pred_region
      %49 = dma.done [#allocation3], 256
    $region17: #{tpu_custom_call.1} parent=1 // pred_fallthru
      _
    // Predicated region
    $region18: #{tpu_custom_call.1} parent=1 // pred_check
      _
    $region19: #{tpu_custom_call.1} parent=1 // pred_check_branch
      %51 = sbr.rel (0) target = $region21
    $region20: #{tpu_custom_call.1} parent=1 // pred_region
      %52 = dma.done [#allocation6], 768
    $region21: #{tpu_custom_call.1} parent=1 // pred_fallthru
      _
    // Predicated region
    $region22: #{tpu_custom_call.1} parent=1 // pred_check
      _
    $region23: #{tpu_custom_call.1} parent=1 // pred_check_branch
      %54 = sbr.rel (0) target = $region25
    $region24: #{tpu_custom_call.1} parent=1 // pred_region
      %55 = dma.done [#allocation6], 256
    $region25: #{tpu_custom_call.1} parent=1 // pred_fallthru
      _
    %v57 = vld [vmem:[#allocation2] sm:$0xf]
    %v58 = vld [vmem:[#allocation2 + $0x4] sm:$0xf]
    %v59 = vld [vmem:[#allocation2 + $0x8] sm:$0xf]
    %v60 = vld [vmem:[#allocation2 + $0xc] sm:$0xf]
    %v61 = vld [vmem:[#allocation7] sm:$0xf]
    %v62 = vld [vmem:[#allocation7 + $0x4] sm:$0xf]
    %v63 = vld [vmem:[#allocation7 + $0x8] sm:$0xf]
    %v64 = vld [vmem:[#allocation7 + $0xc] sm:$0xf]
    %v69 = vunpack.c.l.b16 %v57
    %v70 = vunpack.c.l.b16 %v58
    %v71 = vunpack.c.l.b16 %v59
    %v72 = vunpack.c.l.b16 %v60
    %v73 = vpack.c.b16 %v70, %v69
    %v74 = vpack.c.b16 %v72, %v71
    %v79 = vunpack.c.l.b16 %v61
    %v80 = vunpack.c.l.b16 %v62
    %v81 = vunpack.c.l.b16 %v63
    %v82 = vunpack.c.l.b16 %v64
    %v83 = vpack.c.b16 %v80, %v79
    %v84 = vpack.c.b16 %v82, %v81
    %vm87 = vcmask 261120
    %v89 = vsel %vm87, %v73, 0
    %v92 = vsel %vm87, %v74, 0
    %94 = vmatprep.subr.bf16.mxu0 0
    %95 = vmatpush1.bf16.msra.mxu0 %v83
    %96 = vmatprep.subr.bf16.mxu0 0
    %97 = vmatpush1.bf16.msra.mxu0 %v84
    %98 = vmatprep.subr.bf16.mxu0 0
    %99 = vmatpush1.bf16.msra.mxu0 0
    %100 = vmatprep.subr.bf16.mxu0 0
    %101 = vmatpush1.bf16.msra.mxu0 0
    %102 = vmatprep.subr.bf16.mxu0 0
    %103 = vmatpush1.bf16.msra.mxu0 0
    %104 = vmatprep.subr.bf16.mxu0 0
    %105 = vmatpush1.bf16.msra.mxu0 0
    %106 = vmatprep.subr.bf16.mxu0 0
    %107 = vmatpush1.bf16.msra.mxu0 0
    %108 = vmatprep.subr.bf16.mxu0 0
    %109 = vmatpush1.bf16.msra.mxu0 0
    %110 = vmatprep.subr.bf16.mxu0 0
    %111 = vmatpush1.bf16.msra.mxu0 0
    %112 = vmatprep.subr.bf16.mxu0 0
    %113 = vmatpush1.bf16.msra.mxu0 0
    %114 = vmatprep.subr.bf16.mxu0 0
    %115 = vmatpush1.bf16.msra.mxu0 0
    %116 = vmatprep.subr.bf16.mxu0 0
    %117 = vmatpush1.bf16.msra.mxu0 0
    %118 = vmatprep.subr.bf16.mxu0 0
    %119 = vmatpush1.bf16.msra.mxu0 0
    %120 = vmatprep.subr.bf16.mxu0 0
    %121 = vmatpush1.bf16.msra.mxu0 0
    %122 = vmatprep.subr.bf16.mxu0 0
    %123 = vmatpush1.bf16.msra.mxu0 0
    %124 = vmatprep.subr.bf16.mxu0 0
    %125 = vmatpush1.bf16.msra.mxu0 0
    %126 = vmatprep.mubr.bf16.mxu0 0
    %127 = vmatmul.mubr.bf16.gmra.mrb[0].mxu0 %v89
    %v128 = vpop.f32.mrb[0].mxu0
    %v129 = vadd.f32 0.0, %v128
    %v130 = vpop.f32.mrb[0].mxu0
    %v131 = vpop.f32.mrb[0].mxu0
    %v132 = vadd.f32 0.0, %v131
    %v133 = vpop.f32.mrb[0].mxu0
    %134 = vmatprep.mubr.bf16.mxu0 0
    %135 = vmatmul.mubr.bf16.gmra.mrb[0].mxu0 %v92
    %v136 = vpop.f32.mrb[0].mxu0
    %v137 = vadd.f32 0.0, %v136
    %v138 = vpop.f32.mrb[0].mxu0
    %v139 = vpop.f32.mrb[0].mxu0
    %v140 = vadd.f32 0.0, %v139
    %v141 = vpop.f32.mrb[0].mxu0
    %142 = vdwg.mxu0
    %v143 = vpack.c.bf16 %v132, %v129
    %v144 = vpack.c.bf16 %v140, %v137
    %v145 = vld [vmem:[#allocation5] sm:$0xf]
    %v146 = vld [vmem:[#allocation5 + $0x4] sm:$0xf]
    %v147 = vld [vmem:[#allocation5 + $0x8] sm:$0xf]
    %v148 = vld [vmem:[#allocation5 + $0xc] sm:$0xf]
    %v149 = vld [vmem:[#allocation5 + $0x10] sm:$0xf]
    %v150 = vld [vmem:[#allocation5 + $0x14] sm:$0xf]
    %v151 = vld [vmem:[#allocation5 + $0x18] sm:$0xf]
    %v152 = vld [vmem:[#allocation5 + $0x1c] sm:$0xf]
    %v153 = vld [vmem:[#allocation5 + $0x20] sm:$0xf]
    %v154 = vld [vmem:[#allocation5 + $0x24] sm:$0xf]
    %v155 = vld [vmem:[#allocation5 + $0x28] sm:$0xf]
    %v156 = vld [vmem:[#allocation5 + $0x2c] sm:$0xf]
    %v169 = vunpack.c.l.b16 %v145
    %v170 = vunpack.c.l.b16 %v146
    %v171 = vunpack.c.l.b16 %v147
    %v172 = vunpack.c.l.b16 %v148
    %v173 = vunpack.c.l.b16 %v149
    %v174 = vunpack.c.l.b16 %v150
    %v175 = vunpack.c.l.b16 %v151
    %v176 = vunpack.c.l.b16 %v152
    %v177 = vunpack.c.l.b16 %v153
    %v178 = vunpack.c.l.b16 %v154
    %v179 = vunpack.c.l.b16 %v155
    %v180 = vunpack.c.l.b16 %v156
    %v181 = vpack.c.b16 %v170, %v169
    %v182 = vpack.c.b16 %v172, %v171
    %v183 = vpack.c.b16 %v174, %v173
    %v184 = vpack.c.b16 %v176, %v175
    %v185 = vpack.c.b16 %v178, %v177
    %v186 = vpack.c.b16 %v180, %v179
    %vm193 = vcmask 785408
    %v195 = vsel %vm193, %v143, 0
    %v198 = vsel %vm193, %v144, 0
    %200 = vmatprep.subr.bf16.mxu0 0
    %201 = vmatpush1.bf16.msra.mxu0 %v181
    %202 = vmatprep.subr.bf16.mxu0 0
    %203 = vmatpush1.bf16.msra.mxu0 %v182
    %204 = vmatprep.subr.bf16.mxu0 0
    %205 = vmatpush1.bf16.msra.mxu0 %v183
    %206 = vmatprep.subr.bf16.mxu0 0
    %207 = vmatpush1.bf16.msra.mxu0 %v184
    %208 = vmatprep.subr.bf16.mxu0 0
    %209 = vmatpush1.bf16.msra.mxu0 %v185
    %210 = vmatprep.subr.bf16.mxu0 0
    %211 = vmatpush1.bf16.msra.mxu0 %v186
    %212 = vmatprep.subr.bf16.mxu0 0
    %213 = vmatpush1.bf16.msra.mxu0 0
    %214 = vmatprep.subr.bf16.mxu0 0
    %215 = vmatpush1.bf16.msra.mxu0 0
    %216 = vmatprep.subr.bf16.mxu0 0
    %217 = vmatpush1.bf16.msra.mxu0 0
    %218 = vmatprep.subr.bf16.mxu0 0
    %219 = vmatpush1.bf16.msra.mxu0 0
    %220 = vmatprep.subr.bf16.mxu0 0
    %221 = vmatpush1.bf16.msra.mxu0 0
    %222 = vmatprep.subr.bf16.mxu0 0
    %223 = vmatpush1.bf16.msra.mxu0 0
    %224 = vmatprep.subr.bf16.mxu0 0
    %225 = vmatpush1.bf16.msra.mxu0 0
    %226 = vmatprep.subr.bf16.mxu0 0
    %227 = vmatpush1.bf16.msra.mxu0 0
    %228 = vmatprep.subr.bf16.mxu0 0
    %229 = vmatpush1.bf16.msra.mxu0 0
    %230 = vmatprep.subr.bf16.mxu0 0
    %231 = vmatpush1.bf16.msra.mxu0 0
    %232 = vmatprep.mubr.bf16.mxu0 0
    %233 = vmatmul.mubr.bf16.gmra.mrb[0].mxu0 %v195
    %v234 = vpop.f32.mrb[0].mxu0
    %v235 = vadd.f32 0.0, %v234
    %v236 = vpop.f32.mrb[0].mxu0
    %v237 = vpop.f32.mrb[0].mxu0
    %v238 = vadd.f32 0.0, %v237
    %v239 = vpop.f32.mrb[0].mxu0
    %240 = vmatprep.mubr.bf16.mxu0 0
    %241 = vmatmul.mubr.bf16.gmra.mrb[0].mxu0 %v198
    %v242 = vpop.f32.mrb[0].mxu0
    %v243 = vadd.f32 0.0, %v242
    %v244 = vpop.f32.mrb[0].mxu0
    %v245 = vpop.f32.mrb[0].mxu0
    %v246 = vadd.f32 0.0, %v245
    %v247 = vpop.f32.mrb[0].mxu0
    %248 = vdwg.mxu0
    %249 = vst.msk [vmem:[#allocation8] sm:$0xff] %vm193, %v235
    %250 = vst.msk [vmem:[#allocation8 + $0x8] sm:$0xff] %vm193, %v238
    %251 = vst.msk [vmem:[#allocation8 + $0x10] sm:$0xff] %vm193, %v243
    %252 = vst.msk [vmem:[#allocation8 + $0x18] sm:$0xff] %vm193, %v246
    // Predicated region
    $region26: #{tpu_custom_call.1} parent=1 // pred_check
      _
    $region27: #{tpu_custom_call.1} parent=1 // pred_check_branch
      %254 = sbr.rel (0) target = $region29
    $region28: #{tpu_custom_call.1} parent=1 // pred_region
      %s256 = ssub.s32 512, 512
      %257 = vsyncadd [#allocation4], %s256
      %s258 = sshll.u32 [#allocation8], 4
      %s259 = int_to_ptr.vmem [resolvable:$true] %s258
      %264 = dma.vmem_to_hbm [thread:$0]  %s259, 512, %s3, [#allocation4], 128, 128, 8
    $region29: #{tpu_custom_call.1} parent=1 // pred_fallthru
      _
    // Predicated region
    $region30: #{tpu_custom_call.1} parent=1 // pred_check
      _
    $region31: #{tpu_custom_call.1} parent=1 // pred_check_branch
      %266 = sbr.rel (0) target = $region33
    $region32: #{tpu_custom_call.1} parent=1 // pred_region
      %267 = dma.done [#allocation4], 512
    $region33: #{tpu_custom_call.1} parent=1 // pred_fallthru
      _
    %268 = vsyncpa [#allocation3], 1
    %269 = vsyncpa [#allocation6], 1
    %270 = vsyncpa [#allocation4], 1

</llo_original>
